<compile_context>
chip_gen: v7x
topology: tpu7x:2x2x1
jax: 0.10.0
libtpu: 0.0.40
codegen_flags: <defaults>
</compile_context>

<pallas_src>
import functools

import jax
import jax.numpy as jnp
from jax.experimental import pallas as pl
from jax.experimental.pallas import tpu as pltpu


def _round_up(n, m):
    return ((n + m - 1) // m) * m


def _tpu_vmem_capacity_bytes():
    try:
        return int(getattr(pltpu.get_tpu_info(), "vmem_capacity_bytes", 128 * 1024 * 1024))
    except Exception:
        return 128 * 1024 * 1024


_VMEM_CAP = _tpu_vmem_capacity_bytes()
# v5e/v6e (128 MiB VMEM): bigger row tiles + higher scoped limit; v7x (64 MiB/TC): keep it tight.
_DEFAULT_BLOCK_ROWS = 512 if _VMEM_CAP >= 96 * 1024 * 1024 else 256
_VMEM_LIMIT_BYTES = min(64 * 1024 * 1024, max(32 * 1024 * 1024, _VMEM_CAP // 2))


def _mlp_kernel(x_ref, w1_ref, b1_ref, w2_ref, b2_ref, o_ref):
    # In-kernel bf16 cast of the activation tile: trivial VPU filler; x arrives as a single f32
    # HBM read (no wrapper-side cast copy).
    x = x_ref[...].astype(jnp.bfloat16)
    # hidden = relu(x @ W1 + b1): bf16 MXU operands, f32 accumulate, f32 bias/ReLU (v5e-safe).
    h = jnp.dot(x, w1_ref[...], preferred_element_type=jnp.float32)
    h = jnp.maximum(h + b1_ref[...], 0.0)
    # TODO(synk): dropout is identity at inference (eval mode); a training path would mask with
    # pltpu.prng_seed / pltpu.prng_random_bits.
    out = jnp.dot(h.astype(jnp.bfloat16), w2_ref[...], preferred_element_type=jnp.float32)
    o_ref[...] = (out + b2_ref[...]).astype(o_ref.dtype)


def prepare_params(w1, b1, w2, b2):
    """Pad hidden/emb dims to lane-dense multiples of 128 and cast weights to bf16.

    Call ONCE at init (constants). Padding is exact: zero W1 columns + zero b1 -> ReLU(0)=0,
    zero W2 rows contribute nothing, padded emb columns are sliced off by the caller.
    Returns (padded_params, emb_size).
    """
    hidden, emb = w1.shape[1], w2.shape[1]
    hidden_p, emb_p = _round_up(hidden, 128), _round_up(emb, 128)
    w1_p = jnp.pad(w1, ((0, 0), (0, hidden_p - hidden))).astype(jnp.bfloat16)
    b1_p = jnp.pad(b1, ((0, 0), (0, hidden_p - hidden))).astype(jnp.float32)
    w2_p = jnp.pad(w2, ((0, hidden_p - hidden), (0, emb_p - emb))).astype(jnp.bfloat16)
    b2_p = jnp.pad(b2, ((0, 0), (0, emb_p - emb))).astype(jnp.float32)
    return (w1_p, b1_p, w2_p, b2_p), emb


def _resident_spec(shape, single_buffer):
    """BlockSpec for a grid-invariant operand (same block every step)."""
    index_map = lambda i: (0, 0)
    if single_buffer:
        try:
            # Double-buffering a never-changing block only burns VMEM; single-buffer it.
            return pl.BlockSpec(shape, index_map, pipeline_mode=pl.Buffered(1))
        except TypeError:  # older jax without pipeline_mode kwarg
            pass
    return pl.BlockSpec(shape, index_map)


@functools.partial(jax.jit, static_argnames=("block_rows", "out_dtype"))
def embedding_word_forward_padded(x, w1_p, b1_p, w2_p, b2_p, *,
                                  block_rows=_DEFAULT_BLOCK_ROWS,
                                  out_dtype=jnp.float32):
    """x: [B, indim] f32; padded params from prepare_params().

    Returns the PADDED output [B_p, emb_p]. Slicing back to [B, emb] is left to the caller so it
    can fuse into the consumer instead of materializing an extra HBM copy.
    """
    B, indim = x.shape
    hidden_p = w1_p.shape[1]
    emb_p = w2_p.shape[1]

    align = 16                          # bf16 sublane packing
    B16 = _round_up(B, align)
    if B16 >= 2 * 128:
        # Guarantee >=2 grid steps of >=128 rows so both v7x TensorCores run; still amortizes the
        # ~0.35 us/step overhead. Harmless on single-TC v5e/v6e.
        target = min(block_rows, _round_up(-(-B16 // 2), align))
    else:
        target = min(block_rows, B16)
    eff_block = _round_up(target, align)
    B_p = _round_up(B16, eff_block)

    x_p = x if B_p == B else jnp.pad(x, ((0, B_p - B), (0, 0)))

    # Only single-buffer resident weights when the VMEM saving actually matters (large emb on v7x).
    weight_bytes = w1_p.size * w1_p.dtype.itemsize + w2_p.size * w2_p.dtype.itemsize
    single_buffer = weight_bytes > 4 * 1024 * 1024

    grid = (B_p // eff_block,)
    out_bytes = jnp.dtype(out_dtype).itemsize
    flops = 2 * B_p * (indim * hidden_p + hidden_p * emb_p)
    bytes_accessed = (x_p.size * x_p.dtype.itemsize + weight_bytes
                      + (b1_p.size + b2_p.size) * 4 + B_p * emb_p * out_bytes)

    return pl.pallas_call(
        _mlp_kernel,
        out_shape=jax.ShapeDtypeStruct((B_p, emb_p), out_dtype),
        grid_spec=pltpu.PrefetchScalarGridSpec(
            num_scalar_prefetch=0,
            grid=grid,
            in_specs=[
                # batch rows tiled over the grid; feature dim kept whole (equals full array dim)
                pl.BlockSpec((eff_block, indim), lambda i: (i, 0)),
                # weights / biases: full padded arrays, same block every grid step
                _resident_spec((indim, hidden_p), single_buffer),
                _resident_spec((1, hidden_p), single_buffer),
                _resident_spec((hidden_p, emb_p), single_buffer),
                _resident_spec((1, emb_p), single_buffer),
            ],
            out_specs=pl.BlockSpec((eff_block, emb_p), lambda i: (i, 0)),
        ),
        compiler_params=pltpu.CompilerParams(
            dimension_semantics=("parallel",),      # shards grid steps across TCs on v7x
            vmem_limit_bytes=_VMEM_LIMIT_BYTES,     # generation-gated (32 MiB v7x / 64 MiB v5e,v6e)
        ),
        cost_estimate=pl.CostEstimate(
            flops=flops, transcendentals=0, bytes_accessed=bytes_accessed),
    )(x_p, w1_p, b1_p, w2_p, b2_p)


def embedding_word_forward(x, padded_params, emb_size, *,
                           block_rows=_DEFAULT_BLOCK_ROWS, out_dtype=jnp.float32):
    """Convenience wrapper that slices the padded slab back to [B, emb_size]."""
    out_p = embedding_word_forward_padded(x, *padded_params,
                                          block_rows=block_rows, out_dtype=out_dtype)
    return out_p[: x.shape[0], :emb_size]


def init_params(key, indim, emb_size):
    """Deterministic synthetic init mimicking nn.Linear's uniform(-1/sqrt(fan_in), 1/sqrt(fan_in))."""
    k1, k2, k3, k4 = jax.random.split(key, 4)
    hidden = 300
    bound1 = 1.0 / jnp.sqrt(indim)
    bound2 = 1.0 / jnp.sqrt(hidden)
    # stored pre-transposed: [in, out]
    w1 = jax.random.uniform(k1, (indim, hidden), jnp.float32, -bound1, bound1)
    b1 = jax.random.uniform(k2, (1, hidden), jnp.float32, -bound1, bound1)
    w2 = jax.random.uniform(k3, (hidden, emb_size), jnp.float32, -bound2, bound2)
    b2 = jax.random.uniform(k4, (1, emb_size), jnp.float32, -bound2, bound2)
    return w1, b1, w2, b2


if __name__ == "__main__":
    key = jax.random.PRNGKey(0)
    indim = 32       # input word-feature dim
    emb_size = 64    # output embedding size
    B = 8            # small batch (not a multiple of the row tile)

    kx, kp = jax.random.split(key)
    x = jax.random.normal(kx, (B, indim), jnp.float32)
    w1, b1, w2, b2 = init_params(kp, indim, emb_size)

    padded_params, emb = prepare_params(w1, b1, w2, b2)   # one-time pad + bf16 cast

    out = embedding_word_forward(x, padded_params, emb)
    out = jax.block_until_ready(out)
    assert out.shape == (B, emb_size)
    assert out.dtype == jnp.float32

    # Reference 1: exact f32 math of the PyTorch module in eval mode (loose tol due to bf16 matmuls).
    ref_f32 = jnp.maximum(x @ w1 + b1, 0.0) @ w2 + b2
    assert jnp.allclose(out, ref_f32, atol=3e-2, rtol=3e-2), "mismatch vs f32 reference"

    # Reference 2: same bf16-operand / f32-accumulate recipe as the kernel (tight tol).
    xb, w1b, w2b = (a.astype(jnp.bfloat16) for a in (x, w1, w2))
    h_ref = jnp.maximum(jnp.dot(xb, w1b, preferred_element_type=jnp.float32) + b1, 0.0)
    ref_bf16 = jnp.dot(h_ref.astype(jnp.bfloat16), w2b,
                       preferred_element_type=jnp.float32) + b2
    assert jnp.allclose(out, ref_bf16, atol=2e-3, rtol=2e-3), "mismatch vs bf16-matched reference"

    # Optional bf16 writeback path (halves output HBM bytes when the consumer accepts bf16).
    out_bf16 = jax.block_until_ready(
        embedding_word_forward(x, padded_params, emb, out_dtype=jnp.bfloat16))
    assert out_bf16.shape == (B, emb_size) and out_bf16.dtype == jnp.bfloat16
    assert jnp.allclose(out_bf16.astype(jnp.float32), ref_bf16, atol=3e-2, rtol=3e-2)

    print("KERNEL_OK")
</pallas_src>

<mosaic_0001>
module attributes {stable_mosaic.version = 11 : i64} {
  func.func @_mlp_kernel(%arg0: i32, %arg1: memref<16x32xf32, #tpu.memory_space<vmem>>, %arg2: memref<32x384xbf16, #tpu.memory_space<vmem>>, %arg3: memref<1x384xf32, #tpu.memory_space<vmem>>, %arg4: memref<384x128xbf16, #tpu.memory_space<vmem>>, %arg5: memref<1x128xf32, #tpu.memory_space<vmem>>, %arg6: memref<16x128xf32, #tpu.memory_space<vmem>>) attributes {dimension_semantics = [#tpu.dimension_semantics<parallel>], iteration_bounds = array<i64: 1>, scalar_prefetch = 0 : i64, scratch_operands = 0 : i64, tpu.core_type = #tpu.core_type<tc>, window_params = [{transform_indices = @transform_0, window_bounds = array<i64: 16, 32>}, {pipeline_mode = #tpu.pipeline_mode<synchronous>, transform_indices = @transform_1, window_bounds = array<i64: 32, 384>}, {pipeline_mode = #tpu.pipeline_mode<synchronous>, transform_indices = @transform_2, window_bounds = array<i64: 1, 384>}, {pipeline_mode = #tpu.pipeline_mode<synchronous>, transform_indices = @transform_3, window_bounds = array<i64: 384, 128>}, {pipeline_mode = #tpu.pipeline_mode<synchronous>, transform_indices = @transform_4, window_bounds = array<i64: 1, 128>}, {transform_indices = @transform_5, window_bounds = array<i64: 16, 128>}]} {
    %c0 = arith.constant 0 : index
    %c0_0 = arith.constant 0 : index
    %0 = vector.load %arg1[%c0, %c0_0] : memref<16x32xf32, #tpu.memory_space<vmem>>, vector<16x32xf32>
    %1 = arith.truncf %0 : vector<16x32xf32> to vector<16x32xbf16>
    %c0_1 = arith.constant 0 : index
    %c0_2 = arith.constant 0 : index
    %2 = vector.load %arg2[%c0_1, %c0_2] : memref<32x384xbf16, #tpu.memory_space<vmem>>, vector<32x384xbf16>
    %cst = arith.constant dense<0.000000e+00> : vector<16x384xf32>
    %3 = tpu.matmul %1, %2, %cst {dimension_numbers = #tpu.dot_dimension_numbers<[1], [0], [0], [1], [0, 0, 1, 1], [], []>} : vector<16x32xbf16>, vector<32x384xbf16>, vector<16x384xf32> -> vector<16x384xf32>
    %c0_3 = arith.constant 0 : index
    %c0_4 = arith.constant 0 : index
    %4 = vector.load %arg3[%c0_3, %c0_4] : memref<1x384xf32, #tpu.memory_space<vmem>>, vector<1x384xf32>
    %5 = vector.broadcast %4 : vector<1x384xf32> to vector<16x384xf32>
    %6 = arith.addf %3, %5 : vector<16x384xf32>
    %cst_5 = arith.constant 0.000000e+00 : f32
    %7 = vector.broadcast %cst_5 : f32 to vector<16x384xf32>
    %8 = arith.maximumf %6, %7 : vector<16x384xf32>
    %9 = arith.truncf %8 : vector<16x384xf32> to vector<16x384xbf16>
    %c0_6 = arith.constant 0 : index
    %c0_7 = arith.constant 0 : index
    %10 = vector.load %arg4[%c0_6, %c0_7] : memref<384x128xbf16, #tpu.memory_space<vmem>>, vector<384x128xbf16>
    %cst_8 = arith.constant dense<0.000000e+00> : vector<16x128xf32>
    %11 = tpu.matmul %9, %10, %cst_8 {dimension_numbers = #tpu.dot_dimension_numbers<[1], [0], [0], [1], [0, 0, 1, 1], [], []>} : vector<16x384xbf16>, vector<384x128xbf16>, vector<16x128xf32> -> vector<16x128xf32>
    %c0_9 = arith.constant 0 : index
    %c0_10 = arith.constant 0 : index
    %12 = vector.load %arg5[%c0_9, %c0_10] : memref<1x128xf32, #tpu.memory_space<vmem>>, vector<1x128xf32>
    %13 = vector.broadcast %12 : vector<1x128xf32> to vector<16x128xf32>
    %14 = arith.addf %11, %13 : vector<16x128xf32>
    %c0_11 = arith.constant 0 : index
    %c0_12 = arith.constant 0 : index
    %15 = vector.load %arg6[%c0_11, %c0_12] : memref<16x128xf32, #tpu.memory_space<vmem>>, vector<16x128xf32>
    tpu.vector_store %arg6[%c0_11, %c0_12], %14 {strides = array<i32>} : memref<16x128xf32, #tpu.memory_space<vmem>>, vector<16x128xf32>,
    return
  }
  func.func @transform_0(%arg0: i32) -> (i32, i32) {
    %c0_i32 = arith.constant 0 : i32
    %c0_i32_0 = arith.constant 0 : i32
    return %arg0, %c0_i32 : i32, i32
  }
  func.func @transform_1(%arg0: i32) -> (i32, i32) {
    %c0_i32 = arith.constant 0 : i32
    %c0_i32_0 = arith.constant 0 : i32
    %c0_i32_1 = arith.constant 0 : i32
    return %c0_i32, %c0_i32_0 : i32, i32
  }
  func.func @transform_2(%arg0: i32) -> (i32, i32) {
    %c0_i32 = arith.constant 0 : i32
    %c0_i32_0 = arith.constant 0 : i32
    %c0_i32_1 = arith.constant 0 : i32
    return %c0_i32, %c0_i32_0 : i32, i32
  }
  func.func @transform_3(%arg0: i32) -> (i32, i32) {
    %c0_i32 = arith.constant 0 : i32
    %c0_i32_0 = arith.constant 0 : i32
    %c0_i32_1 = arith.constant 0 : i32
    return %c0_i32, %c0_i32_0 : i32, i32
  }
  func.func @transform_4(%arg0: i32) -> (i32, i32) {
    %c0_i32 = arith.constant 0 : i32
    %c0_i32_0 = arith.constant 0 : i32
    %c0_i32_1 = arith.constant 0 : i32
    return %c0_i32, %c0_i32_0 : i32, i32
  }
  func.func @transform_5(%arg0: i32) -> (i32, i32) {
    %c0_i32 = arith.constant 0 : i32
    %c0_i32_0 = arith.constant 0 : i32
    return %arg0, %c0_i32 : i32, i32
  }
}

</mosaic_0001>

<llo_original>
// kernel: embedding_word_forward_padded.1
$region0: #{embedding_word_forward_padded.1}
  #allocation0 [shape = 'u32[]', space=smem, size = 0x4, offset = 0x4, fixed_abs, tag = 'smem constant byte address 0x4 - core index']
  #allocation1 [shape = 'u32[144,128]{1,0:T(1,128)}', space=vmem, size = 0x12000, scoped, tag = 'internal scratch']
  %s0 = inlined_call_operand.hbm [shape: f32[16,32], index: 0, kind: input, shape index: {}]
  %s1 = inlined_call_operand.hbm [shape: bf16[32,384], index: 1, kind: input, shape index: {}]
  %s2 = inlined_call_operand.hbm [shape: f32[1,384], index: 2, kind: input, shape index: {}]
  %s3 = inlined_call_operand.hbm [shape: bf16[384,128], index: 3, kind: input, shape index: {}]
  %s4 = inlined_call_operand.hbm [shape: f32[1,128], index: 4, kind: input, shape index: {}]
  %s5 = inlined_call_operand.hbm [shape: f32[16,128], index: 5, kind: output, shape index: {}]
  %s6 = sld [smem:[#allocation0]]
  $region50: #{embedding_word_forward_padded.1} parent=0
    _
  %s8 = ssub.s32 1, %s6
  %s9 = scalar_select 0, %s8, %s6
  $region1: #{embedding_word_forward_padded.1} parent=0
    #allocation2 [shape = 'u8[8192]{0}', space=vmem, size = 0x2000, scoped, tag = 'input window, operand 0, single buffered']
    #allocation3 [shape = 's32[1]{0}', space=sflag, size = 0x4, scoped, tag = 'scoped memory for embedding_word_forward_padded.1']
    #allocation4 [shape = 's32[1]{0}', space=sflag, size = 0x4, scoped, tag = 'scoped memory for embedding_word_forward_padded.1']
    #allocation5 [shape = 'u8[24576]{0}', space=vmem, size = 0x6000, scoped, tag = 'input window, operand 1, single buffered']
    #allocation6 [shape = 's32[1]{0}', space=sflag, size = 0x4, scoped, tag = 'scoped memory for embedding_word_forward_padded.1']
    #allocation7 [shape = 'u8[1536]{0}', space=vmem, size = 0x800, scoped, tag = 'input window, operand 2, single buffered']
    #allocation8 [shape = 'u8[98304]{0}', space=vmem, size = 0x18000, scoped, tag = 'input window, operand 3, single buffered']
    #allocation9 [shape = 's32[1]{0}', space=sflag, size = 0x4, scoped, tag = 'scoped memory for embedding_word_forward_padded.1']
    #allocation10 [shape = 'u8[512]{0}', space=vmem, size = 0x400, scoped, tag = 'input window, operand 4, single buffered']
    #allocation11 [shape = 'u8[8192]{0}', space=vmem, size = 0x2000, scoped, tag = 'output window, operand 0, single buffered']
    %10 = vsyncpa [#allocation3], 0
    %11 = vsyncpa [#allocation6], 0
    %12 = vsyncpa [#allocation9], 0
    %13 = vsyncpa [#allocation4], 0
    // Predicated region
    $region2: #{embedding_word_forward_padded.1} parent=1 // pred_check
      _
    $region3: #{embedding_word_forward_padded.1} parent=1 // pred_check_branch
      %15 = sbr.rel (0) target = $region5
    $region4: #{embedding_word_forward_padded.1} parent=1 // pred_region
      %s17 = ssub.s32 256, 256
      %18 = vsyncadd [#allocation3], %s17
      %s19 = sshll.u32 [#allocation2], 4
      %s20 = int_to_ptr.vmem [resolvable:$true] %s19
      %25 = dma.hbm_to_vmem [thread:$0]  %s0, 256, %s20, [#allocation3], 128, 128, 8
    $region5: #{embedding_word_forward_padded.1} parent=1 // pred_fallthru
      _
    // Predicated region
    $region6: #{embedding_word_forward_padded.1} parent=1 // pred_check
      _
    $region7: #{embedding_word_forward_padded.1} parent=1 // pred_check_branch
      %27 = sbr.rel (0) target = $region9
    $region8: #{embedding_word_forward_padded.1} parent=1 // pred_region
      %s29 = ssub.s32 768, 768
      %30 = vsyncadd [#allocation6], %s29
      %s31 = sshll.u32 [#allocation5], 4
      %s32 = int_to_ptr.vmem [resolvable:$true] %s31
      %37 = dma.hbm_to_vmem [thread:$0]  %s1, 768, %s32, [#allocation6], 192, 192, 12
    $region9: #{embedding_word_forward_padded.1} parent=1 // pred_fallthru
      _
    // Predicated region
    $region10: #{embedding_word_forward_padded.1} parent=1 // pred_check
      _
    $region11: #{embedding_word_forward_padded.1} parent=1 // pred_check_branch
      %39 = sbr.rel (0) target = $region13
    $region12: #{embedding_word_forward_padded.1} parent=1 // pred_region
      %s41 = ssub.s32 48, 48
      %42 = vsyncadd [#allocation6], %s41
      %s44 = sshll.u32 [#allocation7], 4
      %s45 = int_to_ptr.vmem [resolvable:$true] %s44
      %47 = dma.hbm_to_vmem [thread:$0]  %s2, 48, %s45, [#allocation6]
    $region13: #{embedding_word_forward_padded.1} parent=1 // pred_fallthru
      _
    // Predicated region
    $region14: #{embedding_word_forward_padded.1} parent=1 // pred_check
      _
    $region15: #{embedding_word_forward_padded.1} parent=1 // pred_check_branch
      %49 = sbr.rel (0) target = $region17
    $region16: #{embedding_word_forward_padded.1} parent=1 // pred_region
      %s51 = ssub.s32 3072, 3072
      %52 = vsyncadd [#allocation9], %s51
      %s53 = sshll.u32 [#allocation8], 4
      %s54 = int_to_ptr.vmem [resolvable:$true] %s53
      %59 = dma.hbm_to_vmem [thread:$0]  %s3, 3072, %s54, [#allocation9], 64, 64, 4
    $region17: #{embedding_word_forward_padded.1} parent=1 // pred_fallthru
      _
    // Predicated region
    $region18: #{embedding_word_forward_padded.1} parent=1 // pred_check
      _
    $region19: #{embedding_word_forward_padded.1} parent=1 // pred_check_branch
      %61 = sbr.rel (0) target = $region21
    $region20: #{embedding_word_forward_padded.1} parent=1 // pred_region
      %s63 = ssub.s32 16, 16
      %64 = vsyncadd [#allocation9], %s63
      %s66 = sshll.u32 [#allocation10], 4
      %s67 = int_to_ptr.vmem [resolvable:$true] %s66
      %69 = dma.hbm_to_vmem [thread:$0]  %s4, 16, %s67, [#allocation9]
    $region21: #{embedding_word_forward_padded.1} parent=1 // pred_fallthru
      _
    // Predicated region
    $region22: #{embedding_word_forward_padded.1} parent=1 // pred_check
      _
    $region23: #{embedding_word_forward_padded.1} parent=1 // pred_check_branch
      %71 = sbr.rel (0) target = $region25
    $region24: #{embedding_word_forward_padded.1} parent=1 // pred_region
      %72 = dma.done [#allocation3], 256
    $region25: #{embedding_word_forward_padded.1} parent=1 // pred_fallthru
      _
    // Predicated region
    $region26: #{embedding_word_forward_padded.1} parent=1 // pred_check
      _
    $region27: #{embedding_word_forward_padded.1} parent=1 // pred_check_branch
      %74 = sbr.rel (0) target = $region29
    $region28: #{embedding_word_forward_padded.1} parent=1 // pred_region
      %75 = dma.done [#allocation6], 768
    $region29: #{embedding_word_forward_padded.1} parent=1 // pred_fallthru
      _
    // Predicated region
    $region30: #{embedding_word_forward_padded.1} parent=1 // pred_check
      _
    $region31: #{embedding_word_forward_padded.1} parent=1 // pred_check_branch
      %77 = sbr.rel (0) target = $region33
    $region32: #{embedding_word_forward_padded.1} parent=1 // pred_region
      %78 = dma.done [#allocation6], 48
    $region33: #{embedding_word_forward_padded.1} parent=1 // pred_fallthru
      _
    // Predicated region
    $region34: #{embedding_word_forward_padded.1} parent=1 // pred_check
      _
    $region35: #{embedding_word_forward_padded.1} parent=1 // pred_check_branch
      %80 = sbr.rel (0) target = $region37
    $region36: #{embedding_word_forward_padded.1} parent=1 // pred_region
      %81 = dma.done [#allocation9], 3072
    $region37: #{embedding_word_forward_padded.1} parent=1 // pred_fallthru
      _
    // Predicated region
    $region38: #{embedding_word_forward_padded.1} parent=1 // pred_check
      _
    $region39: #{embedding_word_forward_padded.1} parent=1 // pred_check_branch
      %83 = sbr.rel (0) target = $region41
    $region40: #{embedding_word_forward_padded.1} parent=1 // pred_region
      %84 = dma.done [#allocation9], 16
    $region41: #{embedding_word_forward_padded.1} parent=1 // pred_fallthru
      _
    %v86 = vld [vmem:[#allocation2] sm:$0xff]
    %v87 = vld [vmem:[#allocation2 + $0x8] sm:$0xff]
    %v88 = vpack.c.bf16 %v87, %v86
    %v89 = vld [vmem:[#allocation5] sm:$0xff]
    %v90 = vld [vmem:[#allocation5 + $0x8] sm:$0xf]
    %v91 = vld [vmem:[#allocation5 + $0xc] sm:$0xff]
    %v92 = vld [vmem:[#allocation5 + $0x14] sm:$0xf]
    %v93 = vld [vmem:[#allocation5 + $0x18] sm:$0xff]
    %v94 = vld [vmem:[#allocation5 + $0x20] sm:$0xf]
    %v95 = vld [vmem:[#allocation5 + $0x24] sm:$0xff]
    %v96 = vld [vmem:[#allocation5 + $0x2c] sm:$0xf]
    %v97 = vld [vmem:[#allocation7] sm:$0x7]
    %v99 = vlaneseq
    %v100 = vshrl.u32 %v99, 7
    %v101 = vsub.s32 0, %v100
    %v102 = vrot.slane %v97, %v101
    %v103 = vlaneseq
    %v104 = vshrl.u32 %v103, 7
    %v105 = vsub.s32 1, %v104
    %v106 = vrot.slane %v97, %v105
    %v107 = vlaneseq
    %v108 = vshrl.u32 %v107, 7
    %v109 = vsub.s32 2, %v108
    %v110 = vrot.slane %v97, %v109
    %v122 = vunpack.c.l.b16 %v89
    %v123 = vunpack.c.h.b16 %v89
    %v124 = vunpack.c.l.b16 %v90
    %v125 = vunpack.c.l.b16 %v91
    %v126 = vunpack.c.h.b16 %v91
    %v127 = vunpack.c.l.b16 %v92
    %v128 = vunpack.c.l.b16 %v93
    %v129 = vunpack.c.h.b16 %v93
    %v130 = vunpack.c.l.b16 %v94
    %v131 = vunpack.c.l.b16 %v95
    %v132 = vunpack.c.h.b16 %v95
    %v133 = vunpack.c.l.b16 %v96
    %v134 = vpack.c.b16 %v125, %v122
    %v135 = vpack.c.b16 %v126, %v123
    %v136 = vpack.c.b16 %v127, %v124
    %v137 = vpack.c.b16 %v131, %v128
    %v138 = vpack.c.b16 %v132, %v129
    %v139 = vpack.c.b16 %v133, %v130
    %vm146 = vcmask 261120
    %v148 = vsel %vm146, %v88, 0
    %150 = vmatprep.subr.bf16.mxu0 %v135
    %151 = vmatpush1.bf16.msra.mxu0 %v134
    %152 = vmatprep.subr.bf16.mxu0 %v138
    %153 = vmatpush1.bf16.msra.mxu0 %v137
    %154 = vmatprep.subr.bf16.mxu0 0
    %155 = vmatpush1.bf16.msra.mxu0 0
    %156 = vmatprep.subr.bf16.mxu0 0
    %157 = vmatpush1.bf16.msra.mxu0 0
    %158 = vmatprep.subr.bf16.mxu0 0
    %159 = vmatpush1.bf16.msra.mxu0 0
    %160 = vmatprep.subr.bf16.mxu0 0
    %161 = vmatpush1.bf16.msra.mxu0 0
    %162 = vmatprep.subr.bf16.mxu0 0
    %163 = vmatpush1.bf16.msra.mxu0 0
    %164 = vmatprep.subr.bf16.mxu0 0
    %165 = vmatpush1.bf16.msra.mxu0 0
    %166 = vmatprep.subr.bf16.mxu0 0
    %167 = vmatpush1.bf16.msra.mxu0 0
    %168 = vmatprep.subr.bf16.mxu0 0
    %169 = vmatpush1.bf16.msra.mxu0 0
    %170 = vmatprep.subr.bf16.mxu0 0
    %171 = vmatpush1.bf16.msra.mxu0 0
    %172 = vmatprep.subr.bf16.mxu0 0
    %173 = vmatpush1.bf16.msra.mxu0 0
    %174 = vmatprep.subr.bf16.mxu0 0
    %175 = vmatpush1.bf16.msra.mxu0 0
    %176 = vmatprep.subr.bf16.mxu0 0
    %177 = vmatpush1.bf16.msra.mxu0 0
    %178 = vmatprep.subr.bf16.mxu0 0
    %179 = vmatpush1.bf16.msra.mxu0 0
    %180 = vmatprep.subr.bf16.mxu0 0
    %181 = vmatpush1.bf16.msra.mxu0 0
    %182 = vmatprep.mubr.bf16.mxu0 0
    %183 = vmatmul.mubr.bf16.gmra.mrb[0].mxu0 %v148
    %v184 = vpop.f32.mrb[0].mxu0
    %v185 = vadd.f32 %v102, %v184
    %v186 = vpop.f32.mrb[0].mxu0
    %v187 = vadd.f32 %v106, %v186
    %v188 = vpop.f32.mrb[0].mxu0
    %v189 = vadd.f32 %v102, %v188
    %v190 = vpop.f32.mrb[0].mxu0
    %v191 = vadd.f32 %v106, %v190
    %192 = vdwg.mxu0
    %193 = vmatprep.subr.bf16.mxu0 0
    %194 = vmatpush1.bf16.msra.mxu0 %v136
    %195 = vmatprep.subr.bf16.mxu0 0
    %196 = vmatpush1.bf16.msra.mxu0 %v139
    %197 = vmatprep.subr.bf16.mxu0 0
    %198 = vmatpush1.bf16.msra.mxu0 0
    %199 = vmatprep.subr.bf16.mxu0 0
    %200 = vmatpush1.bf16.msra.mxu0 0
    %201 = vmatprep.subr.bf16.mxu0 0
    %202 = vmatpush1.bf16.msra.mxu0 0
    %203 = vmatprep.subr.bf16.mxu0 0
    %204 = vmatpush1.bf16.msra.mxu0 0
    %205 = vmatprep.subr.bf16.mxu0 0
    %206 = vmatpush1.bf16.msra.mxu0 0
    %207 = vmatprep.subr.bf16.mxu0 0
    %208 = vmatpush1.bf16.msra.mxu0 0
    %209 = vmatprep.subr.bf16.mxu0 0
    %210 = vmatpush1.bf16.msra.mxu0 0
    %211 = vmatprep.subr.bf16.mxu0 0
    %212 = vmatpush1.bf16.msra.mxu0 0
    %213 = vmatprep.subr.bf16.mxu0 0
    %214 = vmatpush1.bf16.msra.mxu0 0
    %215 = vmatprep.subr.bf16.mxu0 0
    %216 = vmatpush1.bf16.msra.mxu0 0
    %217 = vmatprep.subr.bf16.mxu0 0
    %218 = vmatpush1.bf16.msra.mxu0 0
    %219 = vmatprep.subr.bf16.mxu0 0
    %220 = vmatpush1.bf16.msra.mxu0 0
    %221 = vmatprep.subr.bf16.mxu0 0
    %222 = vmatpush1.bf16.msra.mxu0 0
    %223 = vmatprep.subr.bf16.mxu0 0
    %224 = vmatpush1.bf16.msra.mxu0 0
    %225 = vmatprep.mubr.bf16.mxu0 0
    %226 = vmatmul.mubr.bf16.gmra.mrb[0].mxu0 %v148
    %v227 = vpop.f32.mrb[0].mxu0
    %v228 = vadd.f32 %v110, %v227
    %v229 = vpop.f32.mrb[0].mxu0
    %v230 = vpop.f32.mrb[0].mxu0
    %v231 = vadd.f32 %v110, %v230
    %v232 = vpop.f32.mrb[0].mxu0
    %233 = vdwg.mxu0
    %v234 = vmax.f32 %v185, 0.0
    %v235 = vmax.f32 %v187, 0.0
    %v236 = vmax.f32 %v228, 0.0
    %v237 = vmax.f32 %v189, 0.0
    %v238 = vmax.f32 %v191, 0.0
    %v239 = vmax.f32 %v231, 0.0
    %v240 = vpack.c.bf16 %v237, %v234
    %v241 = vpack.c.bf16 %v238, %v235
    %v242 = vpack.c.bf16 %v239, %v236
    %v243 = vld [vmem:[#allocation8] sm:$0xf]
    %v244 = vld [vmem:[#allocation8 + $0x4] sm:$0xf]
    %v245 = vld [vmem:[#allocation8 + $0x8] sm:$0xf]
    %v246 = vld [vmem:[#allocation8 + $0xc] sm:$0xf]
    %v247 = vld [vmem:[#allocation8 + $0x10] sm:$0xf]
    %v248 = vld [vmem:[#allocation8 + $0x14] sm:$0xf]
    %v249 = vld [vmem:[#allocation8 + $0x18] sm:$0xf]
    %v250 = vld [vmem:[#allocation8 + $0x1c] sm:$0xf]
    %v251 = vld [vmem:[#allocation8 + $0x20] sm:$0xf]
    %v252 = vld [vmem:[#allocation8 + $0x24] sm:$0xf]
    %v253 = vld [vmem:[#allocation8 + $0x28] sm:$0xf]
    %v254 = vld [vmem:[#allocation8 + $0x2c] sm:$0xf]
    %v255 = vld [vmem:[#allocation8 + $0x30] sm:$0xf]
    %v256 = vld [vmem:[#allocation8 + $0x34] sm:$0xf]
    %v257 = vld [vmem:[#allocation8 + $0x38] sm:$0xf]
    %v258 = vld [vmem:[#allocation8 + $0x3c] sm:$0xf]
    %v259 = vld [vmem:[#allocation8 + $0x40] sm:$0xf]
    %v260 = vld [vmem:[#allocation8 + $0x44] sm:$0xf]
    %v261 = vld [vmem:[#allocation8 + $0x48] sm:$0xf]
    %v262 = vld [vmem:[#allocation8 + $0x4c] sm:$0xf]
    %v263 = vld [vmem:[#allocation8 + $0x50] sm:$0xf]
    %v264 = vld [vmem:[#allocation8 + $0x54] sm:$0xf]
    %v265 = vld [vmem:[#allocation8 + $0x58] sm:$0xf]
    %v266 = vld [vmem:[#allocation8 + $0x5c] sm:$0xf]
    %v267 = vld [vmem:[#allocation8 + $0x60] sm:$0xf]
    %v268 = vld [vmem:[#allocation8 + $0x64] sm:$0xf]
    %v269 = vld [vmem:[#allocation8 + $0x68] sm:$0xf]
    %v270 = vld [vmem:[#allocation8 + $0x6c] sm:$0xf]
    %v271 = vld [vmem:[#allocation8 + $0x70] sm:$0xf]
    %v272 = vld [vmem:[#allocation8 + $0x74] sm:$0xf]
    %v273 = vld [vmem:[#allocation8 + $0x78] sm:$0xf]
    %v274 = vld [vmem:[#allocation8 + $0x7c] sm:$0xf]
    %v275 = vld [vmem:[#allocation8 + $0x80] sm:$0xf]
    %v276 = vld [vmem:[#allocation8 + $0x84] sm:$0xf]
    %v277 = vld [vmem:[#allocation8 + $0x88] sm:$0xf]
    %v278 = vld [vmem:[#allocation8 + $0x8c] sm:$0xf]
    %v279 = vld [vmem:[#allocation8 + $0x90] sm:$0xf]
    %v280 = vld [vmem:[#allocation8 + $0x94] sm:$0xf]
    %v281 = vld [vmem:[#allocation8 + $0x98] sm:$0xf]
    %v282 = vld [vmem:[#allocation8 + $0x9c] sm:$0xf]
    %v283 = vld [vmem:[#allocation8 + $0xa0] sm:$0xf]
    %v284 = vld [vmem:[#allocation8 + $0xa4] sm:$0xf]
    %v285 = vld [vmem:[#allocation8 + $0xa8] sm:$0xf]
    %v286 = vld [vmem:[#allocation8 + $0xac] sm:$0xf]
    %v287 = vld [vmem:[#allocation8 + $0xb0] sm:$0xf]
    %v288 = vld [vmem:[#allocation8 + $0xb4] sm:$0xf]
    %v289 = vld [vmem:[#allocation8 + $0xb8] sm:$0xf]
    %v290 = vld [vmem:[#allocation8 + $0xbc] sm:$0xf]
    %v291 = vld [vmem:[#allocation10] sm:$0x1]
    %v293 = vlaneseq
    %v294 = vshrl.u32 %v293, 7
    %v295 = vsub.s32 0, %v294
    %v296 = vrot.slane %v291, %v295
    %v346 = vunpack.c.l.b16 %v243
    %v347 = vunpack.c.l.b16 %v244
    %v348 = vunpack.c.l.b16 %v245
    %v349 = vunpack.c.l.b16 %v246
    %v350 = vunpack.c.l.b16 %v247
    %v351 = vunpack.c.l.b16 %v248
    %v352 = vunpack.c.l.b16 %v249
    %v353 = vunpack.c.l.b16 %v250
    %v354 = vunpack.c.l.b16 %v251
    %v355 = vunpack.c.l.b16 %v252
    %v356 = vunpack.c.l.b16 %v253
    %v357 = vunpack.c.l.b16 %v254
    %v358 = vunpack.c.l.b16 %v255
    %v359 = vunpack.c.l.b16 %v256
    %v360 = vunpack.c.l.b16 %v257
    %v361 = vunpack.c.l.b16 %v258
    %v362 = vunpack.c.l.b16 %v259
    %v363 = vunpack.c.l.b16 %v260
    %v364 = vunpack.c.l.b16 %v261
    %v365 = vunpack.c.l.b16 %v262
    %v366 = vunpack.c.l.b16 %v263
    %v367 = vunpack.c.l.b16 %v264
    %v368 = vunpack.c.l.b16 %v265
    %v369 = vunpack.c.l.b16 %v266
    %v370 = vunpack.c.l.b16 %v267
    %v371 = vunpack.c.l.b16 %v268
    %v372 = vunpack.c.l.b16 %v269
    %v373 = vunpack.c.l.b16 %v270
    %v374 = vunpack.c.l.b16 %v271
    %v375 = vunpack.c.l.b16 %v272
    %v376 = vunpack.c.l.b16 %v273
    %v377 = vunpack.c.l.b16 %v274
    %v378 = vunpack.c.l.b16 %v275
    %v379 = vunpack.c.l.b16 %v276
    %v380 = vunpack.c.l.b16 %v277
    %v381 = vunpack.c.l.b16 %v278
    %v382 = vunpack.c.l.b16 %v279
    %v383 = vunpack.c.l.b16 %v280
    %v384 = vunpack.c.l.b16 %v281
    %v385 = vunpack.c.l.b16 %v282
    %v386 = vunpack.c.l.b16 %v283
    %v387 = vunpack.c.l.b16 %v284
    %v388 = vunpack.c.l.b16 %v285
    %v389 = vunpack.c.l.b16 %v286
    %v390 = vunpack.c.l.b16 %v287
    %v391 = vunpack.c.l.b16 %v288
    %v392 = vunpack.c.l.b16 %v289
    %v393 = vunpack.c.l.b16 %v290
    %v394 = vpack.c.b16 %v347, %v346
    %v395 = vpack.c.b16 %v349, %v348
    %v396 = vpack.c.b16 %v351, %v350
    %v397 = vpack.c.b16 %v353, %v352
    %v398 = vpack.c.b16 %v355, %v354
    %v399 = vpack.c.b16 %v357, %v356
    %v400 = vpack.c.b16 %v359, %v358
    %v401 = vpack.c.b16 %v361, %v360
    %v402 = vpack.c.b16 %v363, %v362
    %v403 = vpack.c.b16 %v365, %v364
    %v404 = vpack.c.b16 %v367, %v366
    %v405 = vpack.c.b16 %v369, %v368
    %v406 = vpack.c.b16 %v371, %v370
    %v407 = vpack.c.b16 %v373, %v372
    %v408 = vpack.c.b16 %v375, %v374
    %v409 = vpack.c.b16 %v377, %v376
    %v410 = vpack.c.b16 %v379, %v378
    %v411 = vpack.c.b16 %v381, %v380
    %v412 = vpack.c.b16 %v383, %v382
    %v413 = vpack.c.b16 %v385, %v384
    %v414 = vpack.c.b16 %v387, %v386
    %v415 = vpack.c.b16 %v389, %v388
    %v416 = vpack.c.b16 %v391, %v390
    %v417 = vpack.c.b16 %v393, %v392
    %442 = vmatprep.subr.bf16.mxu0 0
    %443 = vmatpush1.bf16.msra.mxu0 %v394
    %444 = vmatprep.subr.bf16.mxu0 0
    %445 = vmatpush1.bf16.msra.mxu0 %v395
    %446 = vmatprep.subr.bf16.mxu0 0
    %447 = vmatpush1.bf16.msra.mxu0 %v396
    %448 = vmatprep.subr.bf16.mxu0 0
    %449 = vmatpush1.bf16.msra.mxu0 %v397
    %450 = vmatprep.subr.bf16.mxu0 0
    %451 = vmatpush1.bf16.msra.mxu0 %v398
    %452 = vmatprep.subr.bf16.mxu0 0
    %453 = vmatpush1.bf16.msra.mxu0 %v399
    %454 = vmatprep.subr.bf16.mxu0 0
    %455 = vmatpush1.bf16.msra.mxu0 %v400
    %456 = vmatprep.subr.bf16.mxu0 0
    %457 = vmatpush1.bf16.msra.mxu0 %v401
    %458 = vmatprep.subr.bf16.mxu0 0
    %459 = vmatpush1.bf16.msra.mxu0 %v402
    %460 = vmatprep.subr.bf16.mxu0 0
    %461 = vmatpush1.bf16.msra.mxu0 %v403
    %462 = vmatprep.subr.bf16.mxu0 0
    %463 = vmatpush1.bf16.msra.mxu0 %v404
    %464 = vmatprep.subr.bf16.mxu0 0
    %465 = vmatpush1.bf16.msra.mxu0 %v405
    %466 = vmatprep.subr.bf16.mxu0 0
    %467 = vmatpush1.bf16.msra.mxu0 %v406
    %468 = vmatprep.subr.bf16.mxu0 0
    %469 = vmatpush1.bf16.msra.mxu0 %v407
    %470 = vmatprep.subr.bf16.mxu0 0
    %471 = vmatpush1.bf16.msra.mxu0 %v408
    %472 = vmatprep.subr.bf16.mxu0 0
    %473 = vmatpush1.bf16.msra.mxu0 %v409
    %474 = vmatprep.mubr.bf16.mxu0 %v241
    %475 = vmatmul.mubr.bf16.gmra.mrb[0].mxu0 %v240
    %v476 = vpop.f32.mrb[0].mxu0
    %v477 = vadd.f32 %v296, %v476
    %v478 = vpop.f32.mrb[0].mxu0
    %v479 = vpop.f32.mrb[0].mxu0
    %v480 = vadd.f32 %v296, %v479
    %v481 = vpop.f32.mrb[0].mxu0
    %482 = vdwg.mxu0
    %483 = vmatprep.subr.bf16.mxu0 0
    %484 = vmatpush1.bf16.msra.mxu0 %v410
    %485 = vmatprep.subr.bf16.mxu0 0
    %486 = vmatpush1.bf16.msra.mxu0 %v411
    %487 = vmatprep.subr.bf16.mxu0 0
    %488 = vmatpush1.bf16.msra.mxu0 %v412
    %489 = vmatprep.subr.bf16.mxu0 0
    %490 = vmatpush1.bf16.msra.mxu0 %v413
    %491 = vmatprep.subr.bf16.mxu0 0
    %492 = vmatpush1.bf16.msra.mxu0 %v414
    %493 = vmatprep.subr.bf16.mxu0 0
    %494 = vmatpush1.bf16.msra.mxu0 %v415
    %495 = vmatprep.subr.bf16.mxu0 0
    %496 = vmatpush1.bf16.msra.mxu0 %v416
    %497 = vmatprep.subr.bf16.mxu0 0
    %498 = vmatpush1.bf16.msra.mxu0 %v417
    %499 = vmatprep.subr.bf16.mxu0 0
    %500 = vmatpush1.bf16.msra.mxu0 0
    %501 = vmatprep.subr.bf16.mxu0 0
    %502 = vmatpush1.bf16.msra.mxu0 0
    %503 = vmatprep.subr.bf16.mxu0 0
    %504 = vmatpush1.bf16.msra.mxu0 0
    %505 = vmatprep.subr.bf16.mxu0 0
    %506 = vmatpush1.bf16.msra.mxu0 0
    %507 = vmatprep.subr.bf16.mxu0 0
    %508 = vmatpush1.bf16.msra.mxu0 0
    %509 = vmatprep.subr.bf16.mxu0 0
    %510 = vmatpush1.bf16.msra.mxu0 0
    %511 = vmatprep.subr.bf16.mxu0 0
    %512 = vmatpush1.bf16.msra.mxu0 0
    %513 = vmatprep.subr.bf16.mxu0 0
    %514 = vmatpush1.bf16.msra.mxu0 0
    %515 = vmatprep.mubr.bf16.mxu0 0
    %516 = vmatmul.mubr.bf16.gmra.mrb[0].mxu0 %v242
    %v517 = vpop.f32.mrb[0].mxu0
    %v518 = vadd.f32 %v477, %v517
    %v519 = vpop.f32.mrb[0].mxu0
    %v520 = vpop.f32.mrb[0].mxu0
    %v521 = vadd.f32 %v480, %v520
    %v522 = vpop.f32.mrb[0].mxu0
    %523 = vdwg.mxu0
    %524 = vst [vmem:[#allocation11] sm:$0xff] %v518
    %525 = vst [vmem:[#allocation11 + $0x8] sm:$0xff] %v521
    // Predicated region
    $region42: #{embedding_word_forward_padded.1} parent=1 // pred_check
      _
    $region43: #{embedding_word_forward_padded.1} parent=1 // pred_check_branch
      %527 = sbr.rel (0) target = $region45
    $region44: #{embedding_word_forward_padded.1} parent=1 // pred_region
      %s529 = ssub.s32 256, 256
      %530 = vsyncadd [#allocation4], %s529
      %s531 = sshll.u32 [#allocation11], 4
      %s532 = int_to_ptr.vmem [resolvable:$true] %s531
      %537 = dma.vmem_to_hbm [thread:$0]  %s532, 256, %s5, [#allocation4], 128, 128, 8
    $region45: #{embedding_word_forward_padded.1} parent=1 // pred_fallthru
      _
    // Predicated region
    $region46: #{embedding_word_forward_padded.1} parent=1 // pred_check
      _
    $region47: #{embedding_word_forward_padded.1} parent=1 // pred_check_branch
      %539 = sbr.rel (0) target = $region49
    $region48: #{embedding_word_forward_padded.1} parent=1 // pred_region
      %540 = dma.done [#allocation4], 256
    $region49: #{embedding_word_forward_padded.1} parent=1 // pred_fallthru
      _
    %541 = vsyncpa [#allocation3], 1
    %542 = vsyncpa [#allocation6], 1
    %543 = vsyncpa [#allocation9], 1
    %544 = vsyncpa [#allocation4], 1

</llo_original>
